<compile_context>
chip_gen: v6e
topology: v6e:2x2x1
jax: 0.10.0
libtpu: 0.0.40
codegen_flags: <defaults>
</compile_context>

<pallas_src>
import functools
import math

import jax
import jax.numpy as jnp
from jax import lax
from jax.experimental import pallas as pl
from jax.experimental.pallas import tpu as pltpu

EPS = 1e-5
LANE = 128
VMEM_LIMIT = 32 * 1024 * 1024  # safe on v5e/v6e (128 MiB phys) and v7x (64 MiB phys)


def _round_up(x, m):
    return (x + m - 1) // m * m


# ----------------------------- Pallas kernels ------------------------------ #

def _matmul_stats_kernel(x_ref, w_ref, g_ref, b_ref,
                         y_ref, scale_ref, shift_ref,
                         sum_ref, sq_ref, *, inv_m):
    """Phase 1: y = x @ W (bf16 in, f32 acc), accumulate sum / sum-of-squares
    across the M grid, finalize fused BN scale/shift on the last grid step."""
    i = pl.program_id(0)

    @pl.when(i == 0)
    def _():
        sum_ref[...] = jnp.zeros_like(sum_ref)
        sq_ref[...] = jnp.zeros_like(sq_ref)

    y = jnp.dot(x_ref[...], w_ref[...], preferred_element_type=jnp.float32)
    y_ref[...] = y

    # One-pass stats: var = E[y^2] - E[y]^2 (single traversal of y for sums).
    sum_ref[...] += jnp.sum(y, axis=0, keepdims=True)
    sq_ref[...] += jnp.sum(y * y, axis=0, keepdims=True)

    @pl.when(i == pl.num_programs(0) - 1)
    def _():
        mean = sum_ref[...] * inv_m
        var = jnp.maximum(sq_ref[...] * inv_m - mean * mean, 0.0)
        scale = g_ref[...] * lax.rsqrt(var + EPS)
        scale_ref[...] = scale
        shift_ref[...] = b_ref[...] - mean * scale


def _norm_relu_kernel(y_ref, scale_ref, shift_ref, o_ref):
    """Phase 2: out = relu(y * scale + shift) per M tile."""
    y = y_ref[...]
    o_ref[...] = jnp.maximum(y * scale_ref[...] + shift_ref[...], 0.0).astype(o_ref.dtype)


# ------------------------------- JAX wrapper -------------------------------- #

def dynamic_transition_forward(x_nchw, weight, gamma, beta, *, stride=1,
                               tile_m=None, matmul_dtype=jnp.bfloat16):
    """Forward of DynamicTransition: relu(bn(conv1x1_stride(x))), batch-stat BN."""
    n, cin, h, w = x_nchw.shape
    cout = weight.shape[0]
    assert weight.shape[1] == cin and weight.shape[2] == weight.shape[3] == 1

    # A 1x1 conv with stride is a strided spatial subsample + channel matmul.
    x = jnp.transpose(x_nchw, (0, 2, 3, 1))                 # NHWC
    xs = x[:, ::stride, ::stride, :]
    ho, wo = xs.shape[1], xs.shape[2]
    m = n * ho * wo

    # Lane-align channels to 128 (zero-pad is exact for matmul and for BN stats
    # since we divide by the true M and padded gamma/beta are zero).
    k_pad = _round_up(cin, LANE)
    c_pad = _round_up(cout, LANE)

    if tile_m is None:
        tile_m = min(512, _round_up(m, 8))                  # <=512 rows fits v5e..v7x budgets
    tile_m = _round_up(tile_m, 8)
    m_pad = _round_up(m, tile_m)
    n_tiles = m_pad // tile_m

    x_mat = xs.reshape(m, cin)
    x_mat = jnp.pad(x_mat, ((0, m_pad - m), (0, k_pad - cin))).astype(matmul_dtype)
    w_mat = jnp.transpose(weight.reshape(cout, cin), (1, 0))          # (Cin, Cout)
    w_mat = jnp.pad(w_mat, ((0, k_pad - cin), (0, c_pad - cout))).astype(matmul_dtype)
    g = jnp.pad(gamma.astype(jnp.float32), (0, c_pad - cout)).reshape(1, c_pad)
    b = jnp.pad(beta.astype(jnp.float32), (0, c_pad - cout)).reshape(1, c_pad)

    cparams_reduce = pltpu.CompilerParams(
        dimension_semantics=("arbitrary",),                 # M axis carries the BN reduction
        vmem_limit_bytes=VMEM_LIMIT)
    cparams_parallel = pltpu.CompilerParams(
        dimension_semantics=("parallel",),                  # v7x: both TCs split the grid
        vmem_limit_bytes=VMEM_LIMIT)

    # Phase 1: tiled matmul + cross-tile batch statistics.
    y, scale, shift = pl.pallas_call(
        functools.partial(_matmul_stats_kernel, inv_m=1.0 / m),
        out_shape=(jax.ShapeDtypeStruct((m_pad, c_pad), jnp.float32),
                   jax.ShapeDtypeStruct((1, c_pad), jnp.float32),
                   jax.ShapeDtypeStruct((1, c_pad), jnp.float32)),
        grid_spec=pltpu.PrefetchScalarGridSpec(
            num_scalar_prefetch=0,
            grid=(n_tiles,),
            in_specs=[
                pl.BlockSpec((tile_m, k_pad), lambda i: (i, 0)),   # streamed x tiles
                pl.BlockSpec((k_pad, c_pad), lambda i: (0, 0)),    # resident weight
                pl.BlockSpec((1, c_pad), lambda i: (0, 0)),        # resident gamma
                pl.BlockSpec((1, c_pad), lambda i: (0, 0)),        # resident beta
            ],
            out_specs=[
                pl.BlockSpec((tile_m, c_pad), lambda i: (i, 0)),   # streamed y tiles
                pl.BlockSpec((1, c_pad), lambda i: (0, 0)),        # resident scale
                pl.BlockSpec((1, c_pad), lambda i: (0, 0)),        # resident shift
            ],
            scratch_shapes=[pltpu.VMEM((1, c_pad), jnp.float32),   # running sum
                            pltpu.VMEM((1, c_pad), jnp.float32)]), # running sum-sq
        compiler_params=cparams_reduce,
    )(x_mat, w_mat, g, b)

    # Phase 2: normalize + affine + ReLU, fully parallel over M tiles.
    out = pl.pallas_call(
        _norm_relu_kernel,
        out_shape=jax.ShapeDtypeStruct((m_pad, c_pad), jnp.float32),
        grid_spec=pltpu.PrefetchScalarGridSpec(
            num_scalar_prefetch=0,
            grid=(n_tiles,),
            in_specs=[
                pl.BlockSpec((tile_m, c_pad), lambda i: (i, 0)),
                pl.BlockSpec((1, c_pad), lambda i: (0, 0)),        # resident scale
                pl.BlockSpec((1, c_pad), lambda i: (0, 0)),        # resident shift
            ],
            out_specs=pl.BlockSpec((tile_m, c_pad), lambda i: (i, 0))),
        compiler_params=cparams_parallel,
    )(y, scale, shift)

    out = out[:m, :cout].reshape(n, ho, wo, cout)
    return jnp.transpose(out, (0, 3, 1, 2))                 # back to NCHW


# --------------------------- Pure-JAX reference ----------------------------- #

def reference_forward(x_nchw, weight, gamma, beta, *, stride, conv_dtype=jnp.float32):
    y = lax.conv_general_dilated(
        x_nchw.astype(conv_dtype), weight.astype(conv_dtype),
        (stride, stride), [(0, 0), (0, 0)],
        dimension_numbers=("NCHW", "OIHW", "NCHW"),
        preferred_element_type=jnp.float32)
    mean = y.mean(axis=(0, 2, 3), keepdims=True)
    var = ((y - mean) ** 2).mean(axis=(0, 2, 3), keepdims=True)
    y = (y - mean) * lax.rsqrt(var + EPS)
    y = y * gamma.reshape(1, -1, 1, 1) + beta.reshape(1, -1, 1, 1)
    return jax.nn.relu(y)


# ---------------------------------- main ------------------------------------ #

if __name__ == "__main__":
    # Small shapes consistent with the module: in_planes=4, out_planes=16, stride=2.
    N, CIN, H, W = 2, 4, 16, 16
    COUT = 16
    STRIDE = 2

    key = jax.random.PRNGKey(0)
    ks = jax.random.split(key, 4)

    weight = jax.random.normal(ks[0], (COUT, CIN, 1, 1), jnp.float32) / math.sqrt(CIN)
    gamma = 1.0 + 0.1 * jax.random.normal(ks[1], (COUT,), jnp.float32)
    beta = 0.1 * jax.random.normal(ks[2], (COUT,), jnp.float32)
    x = jax.random.normal(ks[3], (N, CIN, H, W), jnp.float32)

    # tile_m=64 -> 2 M-tiles at this toy size, exercising the cross-tile BN reduction.
    out = dynamic_transition_forward(x, weight, gamma, beta, stride=STRIDE, tile_m=64)
    out = jax.block_until_ready(out)

    assert out.shape == (N, COUT, H // STRIDE, W // STRIDE), out.shape

    # Kernel-logic check at matched precision (bf16 MXU inputs, f32 accumulation).
    ref_bf16 = jax.block_until_ready(
        reference_forward(x, weight, gamma, beta, stride=STRIDE, conv_dtype=jnp.bfloat16))
    assert jnp.allclose(out, ref_bf16, atol=2e-3, rtol=2e-3), \
        f"max abs err vs matched-precision ref: {jnp.max(jnp.abs(out - ref_bf16))}"

    # Semantics sanity vs the pure-f32 module math (difference is only bf16 input rounding).
    ref_f32 = jax.block_until_ready(
        reference_forward(x, weight, gamma, beta, stride=STRIDE))
    assert jnp.allclose(out, ref_f32, atol=5e-2, rtol=5e-2), \
        f"max abs err vs f32 ref: {jnp.max(jnp.abs(out - ref_f32))}"

    print("KERNEL_OK")
</pallas_src>

<mosaic_0001>
module attributes {stable_mosaic.version = 11 : i64} {
  func.func @_matmul_stats_kernel(%arg0: i32, %arg1: memref<64x128xbf16, #tpu.memory_space<vmem>>, %arg2: memref<128x128xbf16, #tpu.memory_space<vmem>>, %arg3: memref<1x128xf32, #tpu.memory_space<vmem>>, %arg4: memref<1x128xf32, #tpu.memory_space<vmem>>, %arg5: memref<64x128xf32, #tpu.memory_space<vmem>>, %arg6: memref<1x128xf32, #tpu.memory_space<vmem>>, %arg7: memref<1x128xf32, #tpu.memory_space<vmem>>, %arg8: memref<1x128xf32, #tpu.memory_space<vmem>>, %arg9: memref<1x128xf32, #tpu.memory_space<vmem>>) attributes {dimension_semantics = [#tpu.dimension_semantics<arbitrary>], iteration_bounds = array<i64: 2>, scalar_prefetch = 0 : i64, scratch_operands = 2 : i64, tpu.core_type = #tpu.core_type<tc>, window_params = [{transform_indices = @transform_0, window_bounds = array<i64: 64, 128>}, {pipeline_mode = #tpu.pipeline_mode<synchronous>, transform_indices = @transform_1, window_bounds = array<i64: 128, 128>}, {pipeline_mode = #tpu.pipeline_mode<synchronous>, transform_indices = @transform_2, window_bounds = array<i64: 1, 128>}, {pipeline_mode = #tpu.pipeline_mode<synchronous>, transform_indices = @transform_3, window_bounds = array<i64: 1, 128>}, {transform_indices = @transform_4, window_bounds = array<i64: 64, 128>}, {pipeline_mode = #tpu.pipeline_mode<synchronous>, transform_indices = @transform_5, window_bounds = array<i64: 1, 128>}, {pipeline_mode = #tpu.pipeline_mode<synchronous>, transform_indices = @transform_6, window_bounds = array<i64: 1, 128>}]} {
    %c0_i32 = arith.constant 0 : i32
    %0 = arith.cmpi eq, %arg0, %c0_i32 : i32
    %1 = arith.extui %0 : i1 to i32
    %c0_i32_0 = arith.constant 0 : i32
    %2 = arith.cmpi ne, %1, %c0_i32_0 : i32
    scf.if %2 {
      %cst_17 = arith.constant 0.000000e+00 : f32
      %21 = vector.broadcast %cst_17 : f32 to vector<1x128xf32>
      %c0_18 = arith.constant 0 : index
      %c0_19 = arith.constant 0 : index
      %22 = vector.load %arg8[%c0_18, %c0_19] : memref<1x128xf32, #tpu.memory_space<vmem>>, vector<1x128xf32>
      tpu.vector_store %arg8[%c0_18, %c0_19], %21 {strides = array<i32>} : memref<1x128xf32, #tpu.memory_space<vmem>>, vector<1x128xf32>,
      %cst_20 = arith.constant 0.000000e+00 : f32
      %23 = vector.broadcast %cst_20 : f32 to vector<1x128xf32>
      %c0_21 = arith.constant 0 : index
      %c0_22 = arith.constant 0 : index
      %24 = vector.load %arg9[%c0_21, %c0_22] : memref<1x128xf32, #tpu.memory_space<vmem>>, vector<1x128xf32>
      tpu.vector_store %arg9[%c0_21, %c0_22], %23 {strides = array<i32>} : memref<1x128xf32, #tpu.memory_space<vmem>>, vector<1x128xf32>,
    } else {
    }
    %c0 = arith.constant 0 : index
    %c0_1 = arith.constant 0 : index
    %3 = vector.load %arg1[%c0, %c0_1] : memref<64x128xbf16, #tpu.memory_space<vmem>>, vector<64x128xbf16>
    %c0_2 = arith.constant 0 : index
    %c0_3 = arith.constant 0 : index
    %4 = vector.load %arg2[%c0_2, %c0_3] : memref<128x128xbf16, #tpu.memory_space<vmem>>, vector<128x128xbf16>
    %cst = arith.constant dense<0.000000e+00> : vector<64x128xf32>
    %5 = tpu.matmul %3, %4, %cst {dimension_numbers = #tpu.dot_dimension_numbers<[1], [0], [0], [1], [0, 0, 1, 1], [], []>} : vector<64x128xbf16>, vector<128x128xbf16>, vector<64x128xf32> -> vector<64x128xf32>
    %c0_4 = arith.constant 0 : index
    %c0_5 = arith.constant 0 : index
    %6 = vector.load %arg5[%c0_4, %c0_5] : memref<64x128xf32, #tpu.memory_space<vmem>>, vector<64x128xf32>
    tpu.vector_store %arg5[%c0_4, %c0_5], %5 {strides = array<i32>} : memref<64x128xf32, #tpu.memory_space<vmem>>, vector<64x128xf32>,
    %c0_6 = arith.constant 0 : index
    %c0_7 = arith.constant 0 : index
    %7 = vector.load %arg8[%c0_6, %c0_7] : memref<1x128xf32, #tpu.memory_space<vmem>>, vector<1x128xf32>
    %cst_8 = arith.constant dense<0.000000e+00> : vector<128xf32>
    %8 = vector.multi_reduction <add>, %5, %cst_8 [0] : vector<64x128xf32> to vector<128xf32>
    %9 = vector.shape_cast %8 : vector<128xf32> to vector<1x128xf32>
    %10 = arith.addf %7, %9 : vector<1x128xf32>
    %c0_9 = arith.constant 0 : index
    %c0_10 = arith.constant 0 : index
    %11 = vector.load %arg8[%c0_9, %c0_10] : memref<1x128xf32, #tpu.memory_space<vmem>>, vector<1x128xf32>
    tpu.vector_store %arg8[%c0_9, %c0_10], %10 {strides = array<i32>} : memref<1x128xf32, #tpu.memory_space<vmem>>, vector<1x128xf32>,
    %c0_11 = arith.constant 0 : index
    %c0_12 = arith.constant 0 : index
    %12 = vector.load %arg9[%c0_11, %c0_12] : memref<1x128xf32, #tpu.memory_space<vmem>>, vector<1x128xf32>
    %13 = arith.mulf %5, %5 : vector<64x128xf32>
    %cst_13 = arith.constant dense<0.000000e+00> : vector<128xf32>
    %14 = vector.multi_reduction <add>, %13, %cst_13 [0] : vector<64x128xf32> to vector<128xf32>
    %15 = vector.shape_cast %14 : vector<128xf32> to vector<1x128xf32>
    %16 = arith.addf %12, %15 : vector<1x128xf32>
    %c0_14 = arith.constant 0 : index
    %c0_15 = arith.constant 0 : index
    %17 = vector.load %arg9[%c0_14, %c0_15] : memref<1x128xf32, #tpu.memory_space<vmem>>, vector<1x128xf32>
    tpu.vector_store %arg9[%c0_14, %c0_15], %16 {strides = array<i32>} : memref<1x128xf32, #tpu.memory_space<vmem>>, vector<1x128xf32>,
    %c1_i32 = arith.constant 1 : i32
    %18 = arith.cmpi eq, %arg0, %c1_i32 : i32
    %19 = arith.extui %18 : i1 to i32
    %c0_i32_16 = arith.constant 0 : i32
    %20 = arith.cmpi ne, %19, %c0_i32_16 : i32
    scf.if %20 {
      %c0_17 = arith.constant 0 : index
      %c0_18 = arith.constant 0 : index
      %21 = vector.load %arg8[%c0_17, %c0_18] : memref<1x128xf32, #tpu.memory_space<vmem>>, vector<1x128xf32>
      %cst_19 = arith.constant 7.812500e-03 : f32
      %22 = vector.broadcast %cst_19 : f32 to vector<1x128xf32>
      %23 = arith.mulf %21, %22 : vector<1x128xf32>
      %c0_20 = arith.constant 0 : index
      %c0_21 = arith.constant 0 : index
      %24 = vector.load %arg9[%c0_20, %c0_21] : memref<1x128xf32, #tpu.memory_space<vmem>>, vector<1x128xf32>
      %cst_22 = arith.constant 7.812500e-03 : f32
      %25 = vector.broadcast %cst_22 : f32 to vector<1x128xf32>
      %26 = arith.mulf %24, %25 : vector<1x128xf32>
      %27 = arith.mulf %23, %23 : vector<1x128xf32>
      %28 = arith.subf %26, %27 : vector<1x128xf32>
      %cst_23 = arith.constant 0.000000e+00 : f32
      %29 = vector.broadcast %cst_23 : f32 to vector<1x128xf32>
      %30 = arith.maximumf %28, %29 : vector<1x128xf32>
      %c0_24 = arith.constant 0 : index
      %c0_25 = arith.constant 0 : index
      %31 = vector.load %arg3[%c0_24, %c0_25] : memref<1x128xf32, #tpu.memory_space<vmem>>, vector<1x128xf32>
      %cst_26 = arith.constant 9.99999974E-6 : f32
      %32 = vector.broadcast %cst_26 : f32 to vector<1x128xf32>
      %33 = arith.addf %30, %32 : vector<1x128xf32>
      %34 = math.rsqrt %33 : vector<1x128xf32>
      %35 = arith.mulf %31, %34 : vector<1x128xf32>
      %c0_27 = arith.constant 0 : index
      %c0_28 = arith.constant 0 : index
      %36 = vector.load %arg6[%c0_27, %c0_28] : memref<1x128xf32, #tpu.memory_space<vmem>>, vector<1x128xf32>
      tpu.vector_store %arg6[%c0_27, %c0_28], %35 {strides = array<i32>} : memref<1x128xf32, #tpu.memory_space<vmem>>, vector<1x128xf32>,
      %c0_29 = arith.constant 0 : index
      %c0_30 = arith.constant 0 : index
      %37 = vector.load %arg4[%c0_29, %c0_30] : memref<1x128xf32, #tpu.memory_space<vmem>>, vector<1x128xf32>
      %38 = arith.mulf %23, %35 : vector<1x128xf32>
      %39 = arith.subf %37, %38 : vector<1x128xf32>
      %c0_31 = arith.constant 0 : index
      %c0_32 = arith.constant 0 : index
      %40 = vector.load %arg7[%c0_31, %c0_32] : memref<1x128xf32, #tpu.memory_space<vmem>>, vector<1x128xf32>
      tpu.vector_store %arg7[%c0_31, %c0_32], %39 {strides = array<i32>} : memref<1x128xf32, #tpu.memory_space<vmem>>, vector<1x128xf32>,
    } else {
    }
    return
  }
  func.func @transform_0(%arg0: i32) -> (i32, i32) {
    %c0_i32 = arith.constant 0 : i32
    %c0_i32_0 = arith.constant 0 : i32
    return %arg0, %c0_i32 : i32, i32
  }
  func.func @transform_1(%arg0: i32) -> (i32, i32) {
    %c0_i32 = arith.constant 0 : i32
    %c0_i32_0 = arith.constant 0 : i32
    %c0_i32_1 = arith.constant 0 : i32
    return %c0_i32, %c0_i32_0 : i32, i32
  }
  func.func @transform_2(%arg0: i32) -> (i32, i32) {
    %c0_i32 = arith.constant 0 : i32
    %c0_i32_0 = arith.constant 0 : i32
    %c0_i32_1 = arith.constant 0 : i32
    return %c0_i32, %c0_i32_0 : i32, i32
  }
  func.func @transform_3(%arg0: i32) -> (i32, i32) {
    %c0_i32 = arith.constant 0 : i32
    %c0_i32_0 = arith.constant 0 : i32
    %c0_i32_1 = arith.constant 0 : i32
    return %c0_i32, %c0_i32_0 : i32, i32
  }
  func.func @transform_4(%arg0: i32) -> (i32, i32) {
    %c0_i32 = arith.constant 0 : i32
    %c0_i32_0 = arith.constant 0 : i32
    return %arg0, %c0_i32 : i32, i32
  }
  func.func @transform_5(%arg0: i32) -> (i32, i32) {
    %c0_i32 = arith.constant 0 : i32
    %c0_i32_0 = arith.constant 0 : i32
    %c0_i32_1 = arith.constant 0 : i32
    return %c0_i32, %c0_i32_0 : i32, i32
  }
  func.func @transform_6(%arg0: i32) -> (i32, i32) {
    %c0_i32 = arith.constant 0 : i32
    %c0_i32_0 = arith.constant 0 : i32
    %c0_i32_1 = arith.constant 0 : i32
    return %c0_i32, %c0_i32_0 : i32, i32
  }
}

</mosaic_0001>

<llo_original>
// kernel: tpu_custom_call.1
$region0: #{tpu_custom_call.1}
  #allocation0 [shape = 'u32[]', space=smem, size = 0x4, offset = 0x4, fixed_abs, tag = 'smem constant byte address 0x4 - core index']
  #allocation1 [shape = 'u32[144,128]{1,0:T(1,128)}', space=vmem, size = 0x12000, scoped, tag = 'internal scratch']
  #allocation2 [shape = 'f32[1,128]{1,0:T(1,128)}', space=vmem, size = 0x200, scoped, tag = 'scratch operand']
  #allocation3 [shape = 'f32[1,128]{1,0:T(1,128)}', space=vmem, size = 0x200, scoped, tag = 'scratch operand']
  %s0 = inlined_call_operand.hbm [shape: bf16[128,128], index: 0, kind: input, shape index: {}]
  %s1 = inlined_call_operand.hbm [shape: bf16[128,128], index: 1, kind: input, shape index: {}]
  %s2 = inlined_call_operand.vmem [shape: f32[1,128], index: 2, kind: input, shape index: {}]
  %s3 = inlined_call_operand.vmem [shape: f32[1,128], index: 3, kind: input, shape index: {}]
  %s4 = inlined_call_operand.hbm [shape: f32[128,128], index: 4, kind: output, shape index: {0}]
  %s5 = inlined_call_operand.hbm [shape: f32[1,128], index: 5, kind: output, shape index: {1}]
  %s6 = inlined_call_operand.hbm [shape: f32[1,128], index: 6, kind: output, shape index: {2}]
  %7 = xla_tuple %s4, %s5, %s6
  %s8 = sld [smem:[#allocation0]]
  $region81: #{tpu_custom_call.1} parent=0
    _
  %s10 = ssub.s32 1, %s8
  %s11 = scalar_select 0, %s10, %s8
  $region1: #{tpu_custom_call.1} parent=0
    #allocation4 [shape = 'u8[32768]{0}', space=vmem, size = 0x8000, scoped, tag = 'input window, operand 0']
    #allocation5 [shape = 's32[2]{0}', space=sflag, size = 0x8, scoped, tag = 'scoped memory for tpu_custom_call.1']
    #allocation6 [shape = 's32[2]{0}', space=sflag, size = 0x8, scoped, tag = 'scoped memory for tpu_custom_call.1']
    #allocation7 [shape = 'u8[32768]{0}', space=vmem, size = 0x8000, scoped, tag = 'input window, operand 1, single buffered']
    #allocation8 [shape = 's32[1]{0}', space=sflag, size = 0x4, scoped, tag = 'scoped memory for tpu_custom_call.1']
    #allocation9 [shape = 'u8[65536]{0}', space=vmem, size = 0x10000, scoped, tag = 'output window, operand 0']
    #allocation10 [shape = 'u8[512]{0}', space=vmem, size = 0x400, scoped, tag = 'output window, operand 1, single buffered']
    #allocation11 [shape = 's32[1]{0}', space=sflag, size = 0x4, scoped, tag = 'scoped memory for tpu_custom_call.1']
    #allocation12 [shape = 'u8[512]{0}', space=vmem, size = 0x400, scoped, tag = 'output window, operand 2, single buffered']
    %12 = vsyncpa [#allocation5], 0
    %s13 = scalar_lea.sflag [#allocation5], 1
    %14 = vsyncpa %s13, 0
    %15 = vsyncpa [#allocation8], 0
    %16 = vsyncpa [#allocation6], 0
    %s17 = scalar_lea.sflag [#allocation6], 1
    %18 = vsyncpa %s17, 0
    %19 = vsyncpa [#allocation11], 0
    loop: start=0, step=1, limit=4
    $region2: #{tpu_custom_call.1} parent=1 // loop_pre_header
      _
    $region3: #{tpu_custom_call.1} parent=1 // loop_header
      %s21 = sphi 0, %s25
      %p22 = scmp.ge.s32.totalorder %s21, 4
      %s31 = sphi 0, %s33
      %s34 = sphi 0, %s31
      %s35 = sphi 0, %s34
      %s51 = sphi 0, %s35
      %s55 = sphi 0, %s55
      %s57 = sphi 0, %s55
      %s58 = sphi 0, %s57
      %s72 = sphi 0, %s58
      %s76 = sphi 0, %s76
      %s78 = sphi 0, %s76
      %s79 = sphi 0, %s78
      %s93 = sphi 0, %s79
      %s97 = sphi 0, %s97
      %s99 = sphi 0, %s97
      %s100 = sphi 0, %s99
      %s114 = sphi 0, %s100
      %s120 = sphi 0, %s122
      %s123 = sphi 0, %s120
      %s124 = sphi 0, %s123
      %s140 = sphi 0, %s124
      %s144 = sphi 0, %s144
      %s146 = sphi 0, %s144
      %s147 = sphi 0, %s146
      %s161 = sphi 0, %s147
      %s165 = sphi 0, %s165
      %s167 = sphi 0, %s165
      %s168 = sphi 0, %s167
      %s182 = sphi 0, %s168
    $region4: #{tpu_custom_call.1} parent=1 // loop_header_branch
      %24 = sbr.rel (%p22) target = $region8
    $region5: #{tpu_custom_call.1} parent=1 // loop_body
      %s26 = ssub.s32 %s21, 1
      %s27 = ssub.s32 %s21, 2
      %s28 = sadd.s32 %s21, 1
      %s29 = ssub.s32 %s21, %s28
      %p30 = scmp.eq.s32.totalorder %s29, 0
      %s32 = sadd.s32 %s31, 1
      %s33 = scalar_select %p30, %s31, %s32
      %p36 = pneg %p30
      %p37 = scmp.eq.s32.totalorder %s21, 1
      %p38 = por %p36, %p37
      %p39 = scmp.ne.s32.totalorder %s31, %s34
      %p40 = scmp.eq.s32.totalorder %s21, 0
      %p41 = por %p39, %p40
      %p42 = scmp.ne.s32.totalorder %s31, %s34
      %p43 = scmp.eq.s32.totalorder %s26, 1
      %p44 = por %p42, %p43
      %p45 = scmp.ne.s32.totalorder %s34, %s35
      %p46 = scmp.eq.s32.totalorder %s26, 0
      %p47 = por %p45, %p46
      %p48 = scmp.ne.s32.totalorder %s34, %s35
      %p49 = scmp.eq.s32.totalorder %s27, 1
      %p50 = por %p48, %p49
      %p52 = scmp.ne.s32.totalorder %s35, %s51
      %p53 = scmp.eq.s32.totalorder %s27, 0
      %p54 = por %p52, %p53
      %s56 = sadd.s32 %s55, 1
      %p59 = scmp.eq.s32.totalorder %s21, 1
      %p60 = scmp.ne.s32.totalorder %s55, %s57
      %p61 = scmp.eq.s32.totalorder %s21, 0
      %p62 = por %p60, %p61
      %p63 = scmp.ne.s32.totalorder %s55, %s57
      %p64 = scmp.eq.s32.totalorder %s26, 1
      %p65 = por %p63, %p64
      %p66 = scmp.ne.s32.totalorder %s57, %s58
      %p67 = scmp.eq.s32.totalorder %s26, 0
      %p68 = por %p66, %p67
      %p69 = scmp.ne.s32.totalorder %s57, %s58
      %p70 = scmp.eq.s32.totalorder %s27, 1
      %p71 = por %p69, %p70
      %p73 = scmp.ne.s32.totalorder %s58, %s72
      %p74 = scmp.eq.s32.totalorder %s27, 0
      %p75 = por %p73, %p74
      %s77 = sadd.s32 %s76, 1
      %p80 = scmp.eq.s32.totalorder %s21, 1
      %p81 = scmp.ne.s32.totalorder %s76, %s78
      %p82 = scmp.eq.s32.totalorder %s21, 0
      %p83 = por %p81, %p82
      %p84 = scmp.ne.s32.totalorder %s76, %s78
      %p85 = scmp.eq.s32.totalorder %s26, 1
      %p86 = por %p84, %p85
      %p87 = scmp.ne.s32.totalorder %s78, %s79
      %p88 = scmp.eq.s32.totalorder %s26, 0
      %p89 = por %p87, %p88
      %p90 = scmp.ne.s32.totalorder %s78, %s79
      %p91 = scmp.eq.s32.totalorder %s27, 1
      %p92 = por %p90, %p91
      %p94 = scmp.ne.s32.totalorder %s79, %s93
      %p95 = scmp.eq.s32.totalorder %s27, 0
      %p96 = por %p94, %p95
      %s98 = sadd.s32 %s97, 1
      %p101 = scmp.eq.s32.totalorder %s21, 1
      %p102 = scmp.ne.s32.totalorder %s97, %s99
      %p103 = scmp.eq.s32.totalorder %s21, 0
      %p104 = por %p102, %p103
      %p105 = scmp.ne.s32.totalorder %s97, %s99
      %p106 = scmp.eq.s32.totalorder %s26, 1
      %p107 = por %p105, %p106
      %p108 = scmp.ne.s32.totalorder %s99, %s100
      %p109 = scmp.eq.s32.totalorder %s26, 0
      %p110 = por %p108, %p109
      %p111 = scmp.ne.s32.totalorder %s99, %s100
      %p112 = scmp.eq.s32.totalorder %s27, 1
      %p113 = por %p111, %p112
      %p115 = scmp.ne.s32.totalorder %s100, %s114
      %p116 = scmp.eq.s32.totalorder %s27, 0
      %p117 = por %p115, %p116
      %s118 = ssub.s32 %s21, %s28
      %p119 = scmp.eq.s32.totalorder %s118, 0
      %s121 = sadd.s32 %s120, 1
      %s122 = scalar_select %p119, %s120, %s121
      %p125 = pneg %p119
      %p126 = scmp.eq.s32.totalorder %s21, 1
      %p127 = por %p125, %p126
      %p128 = scmp.ne.s32.totalorder %s120, %s123
      %p129 = scmp.eq.s32.totalorder %s21, 0
      %p130 = por %p128, %p129
      %p131 = scmp.ne.s32.totalorder %s120, %s123
      %p132 = scmp.eq.s32.totalorder %s26, 1
      %p133 = por %p131, %p132
      %p134 = scmp.ne.s32.totalorder %s123, %s124
      %p135 = scmp.eq.s32.totalorder %s26, 0
      %p136 = por %p134, %p135
      %p137 = scmp.ne.s32.totalorder %s123, %s124
      %p138 = scmp.eq.s32.totalorder %s27, 1
      %p139 = por %p137, %p138
      %p141 = scmp.ne.s32.totalorder %s124, %s140
      %p142 = scmp.eq.s32.totalorder %s27, 0
      %p143 = por %p141, %p142
      %s145 = sadd.s32 %s144, 1
      %p148 = scmp.eq.s32.totalorder %s21, 1
      %p149 = scmp.ne.s32.totalorder %s144, %s146
      %p150 = scmp.eq.s32.totalorder %s21, 0
      %p151 = por %p149, %p150
      %p152 = scmp.ne.s32.totalorder %s144, %s146
      %p153 = scmp.eq.s32.totalorder %s26, 1
      %p154 = por %p152, %p153
      %p155 = scmp.ne.s32.totalorder %s146, %s147
      %p156 = scmp.eq.s32.totalorder %s26, 0
      %p157 = por %p155, %p156
      %p158 = scmp.ne.s32.totalorder %s146, %s147
      %p159 = scmp.eq.s32.totalorder %s27, 1
      %p160 = por %p158, %p159
      %p162 = scmp.ne.s32.totalorder %s147, %s161
      %p163 = scmp.eq.s32.totalorder %s27, 0
      %p164 = por %p162, %p163
      %s166 = sadd.s32 %s165, 1
      %p169 = scmp.eq.s32.totalorder %s21, 1
      %p170 = scmp.ne.s32.totalorder %s165, %s167
      %p171 = scmp.eq.s32.totalorder %s21, 0
      %p172 = por %p170, %p171
      %p173 = scmp.ne.s32.totalorder %s165, %s167
      %p174 = scmp.eq.s32.totalorder %s26, 1
      %p175 = por %p173, %p174
      %p176 = scmp.ne.s32.totalorder %s167, %s168
      %p177 = scmp.eq.s32.totalorder %s26, 0
      %p178 = por %p176, %p177
      %p179 = scmp.ne.s32.totalorder %s167, %s168
      %p180 = scmp.eq.s32.totalorder %s27, 1
      %p181 = por %p179, %p180
      %p183 = scmp.ne.s32.totalorder %s168, %s182
      %p184 = scmp.eq.s32.totalorder %s27, 0
      %p185 = por %p183, %p184
      %p186 = scmp.le.s32.totalorder 1, %s21
      %p187 = scmp.lt.s32.totalorder %s21, 3
      %p188 = pnand %p186, %p187
      %p189 = pneg %p188
      // Predicated region
      $region9: #{tpu_custom_call.1} parent=5 // pred_check
        _
      $region10: #{tpu_custom_call.1} parent=5 // pred_check_branch
        %191 = sbr.rel (%p188) target = $region12
      $region11: #{tpu_custom_call.1} parent=5 // pred_region
        %s192 = ssub.s32 %s21, 1
        // Predicated region
        $region13: #{tpu_custom_call.1} parent=11 // pred_check
          %p193 = pneg %p68
        $region14: #{tpu_custom_call.1} parent=11 // pred_check_branch
          %195 = sbr.rel (%p193) target = $region16
        $region15: #{tpu_custom_call.1} parent=11 // pred_region
          %s197 = ssub.s32 1024, 1024
          %198 = vsyncadd [#allocation8], %s197
          %s199 = sshll.u32 [#allocation7], 4
          %s200 = int_to_ptr.vmem [resolvable:$true] %s199
          %205 = dma.hbm_to_vmem [thread:$0]  %s1, 1024, %s200, [#allocation8], 64, 64, 4
        $region16: #{tpu_custom_call.1} parent=11 // pred_fallthru
          _
        // Predicated region
        $region17: #{tpu_custom_call.1} parent=11 // pred_check
          %p206 = pneg %p89
        $region18: #{tpu_custom_call.1} parent=11 // pred_check_branch
          %208 = sbr.rel (%p206) target = $region20
        $region19: #{tpu_custom_call.1} parent=11 // pred_region
          _
        $region20: #{tpu_custom_call.1} parent=11 // pred_fallthru
          _
        // Predicated region
        $region21: #{tpu_custom_call.1} parent=11 // pred_check
          %p209 = pneg %p110
        $region22: #{tpu_custom_call.1} parent=11 // pred_check_branch
          %211 = sbr.rel (%p209) target = $region24
        $region23: #{tpu_custom_call.1} parent=11 // pred_region
          _
        $region24: #{tpu_custom_call.1} parent=11 // pred_fallthru
          _
      $region12: #{tpu_custom_call.1} parent=5 // pred_fallthru
        _
      %p212 = scmp.lt.s32.totalorder %s21, 2
      // Predicated region
      $region25: #{tpu_custom_call.1} parent=5 // pred_check
        %p213 = pneg %p212
      $region26: #{tpu_custom_call.1} parent=5 // pred_check_branch
        %215 = sbr.rel (%p213) target = $region28
      $region27: #{tpu_custom_call.1} parent=5 // pred_region
        // Predicated region
        $region29: #{tpu_custom_call.1} parent=27 // pred_check
          %p216 = pneg %p41
        $region30: #{tpu_custom_call.1} parent=27 // pred_check_branch
          %218 = sbr.rel (%p216) target = $region32
        $region31: #{tpu_custom_call.1} parent=27 // pred_region
          %s219 = sand.u32 %s31, 1
          %s220 = scalar_lea.sflag [#allocation5], %s219
          %s221 = sand.u32 %s31, 1
          %s222 = smul.addr %s221, 32
          %s223 = scalar_lea.vmem [#allocation4], %s222
          %s224 = smul.u32 8, %s21
          %s226 = ssub.s32 512, 512
          %227 = vsyncadd %s220, %s226
          %s228 = smul.addr %s224, 64
          %s229 = scalar_lea.hbm %s0, %s228
          %s230 = sshll.u32 %s223, 4
          %s231 = int_to_ptr.vmem [resolvable:$true] %s230
          %236 = dma.hbm_to_vmem [thread:$0]  %s229, 512, %s231, %s220, 64, 64, 4
        $region32: #{tpu_custom_call.1} parent=27 // pred_fallthru
          _
      $region28: #{tpu_custom_call.1} parent=5 // pred_fallthru
        _
      %p237 = scmp.le.s32.totalorder 1, %s21
      %p238 = scmp.lt.s32.totalorder %s21, 3
      %p239 = pnand %p237, %p238
      %p240 = pneg %p239
      // Predicated region
      $region33: #{tpu_custom_call.1} parent=5 // pred_check
        _
      $region34: #{tpu_custom_call.1} parent=5 // pred_check_branch
        %242 = sbr.rel (%p239) target = $region36
      $region35: #{tpu_custom_call.1} parent=5 // pred_region
        %s243 = ssub.s32 %s21, 1
        %s244 = sand.u32 %s34, 1
        %s245 = scalar_lea.sflag [#allocation5], %s244
        %s246 = sand.u32 %s34, 1
        %s247 = smul.addr %s246, 32
        %s248 = scalar_lea.vmem [#allocation4], %s247
        // Predicated region
        $region37: #{tpu_custom_call.1} parent=35 // pred_check
          %p249 = pneg %p47
        $region38: #{tpu_custom_call.1} parent=35 // pred_check_branch
          %251 = sbr.rel (%p249) target = $region40
        $region39: #{tpu_custom_call.1} parent=35 // pred_region
          %252 = dma.done %s245, 512
        $region40: #{tpu_custom_call.1} parent=35 // pred_fallthru
          _
        // Predicated region
        $region41: #{tpu_custom_call.1} parent=35 // pred_check
          %p253 = pneg %p68
        $region42: #{tpu_custom_call.1} parent=35 // pred_check_branch
          %255 = sbr.rel (%p253) target = $region44
        $region43: #{tpu_custom_call.1} parent=35 // pred_region
          %256 = dma.done [#allocation8], 1024
        $region44: #{tpu_custom_call.1} parent=35 // pred_fallthru
          _
        %s257 = sand.u32 %s34, 1
        %s258 = scalar_lea.sflag [#allocation5], %s257
        %s259 = sand.u32 %s34, 1
        %s260 = smul.addr %s259, 32
        %s261 = scalar_lea.vmem [#allocation4], %s260
        %p262 = pneg %p47
        %p263 = pneg %p44
        %p264 = pneg %p68
        %p265 = pneg %p65
        %p266 = pneg %p89
        %p267 = pneg %p86
        %p268 = pneg %p110
        %p269 = pneg %p107
        %p270 = pneg %p136
        %p271 = pneg %p133
        %s272 = sand.u32 %s123, 1
        %s273 = scalar_lea.sflag [#allocation6], %s272
        %s274 = sand.u32 %s123, 1
        %s275 = smul.addr %s274, 64
        %s276 = scalar_lea.vmem [#allocation9], %s275
        %p277 = pneg %p157
        %p278 = pneg %p154
        %p279 = pneg %p178
        %p280 = pneg %p175
        %s281 = smul.u32 8, %s26
        %s282 = smul.u32 8, %s26
        %p284 = scmp.eq.s32.totalorder %s26, 0
        // Predicated region
        $region45: #{tpu_custom_call.1} parent=35 // pred_check
          %p285 = pneg %p284
        $region46: #{tpu_custom_call.1} parent=35 // pred_check_branch
          %287 = sbr.rel (%p285) target = $region48
        $region47: #{tpu_custom_call.1} parent=35 // pred_region
          %288 = vst [vmem:[#allocation2] sm:$0x1] 0.0
          %289 = vst [vmem:[#allocation3] sm:$0x1] 0.0
        $region48: #{tpu_custom_call.1} parent=35 // pred_fallthru
          _
        %v290 = vld [vmem:[%s248] sm:$0xf]
        %v291 = vld [vmem:[%s248 + $0x4] sm:$0xf]
        %v292 = vld [vmem:[%s248 + $0x8] sm:$0xf]
        %v293 = vld [vmem:[%s248 + $0xc] sm:$0xf]
        %v294 = vld [vmem:[%s248 + $0x10] sm:$0xf]
        %v295 = vld [vmem:[%s248 + $0x14] sm:$0xf]
        %v296 = vld [vmem:[%s248 + $0x18] sm:$0xf]
        %v297 = vld [vmem:[%s248 + $0x1c] sm:$0xf]
        %v298 = vld [vmem:[#allocation7] sm:$0xf]
        %v299 = vld [vmem:[#allocation7 + $0x4] sm:$0xf]
        %v300 = vld [vmem:[#allocation7 + $0x8] sm:$0xf]
        %v301 = vld [vmem:[#allocation7 + $0xc] sm:$0xf]
        %v302 = vld [vmem:[#allocation7 + $0x10] sm:$0xf]
        %v303 = vld [vmem:[#allocation7 + $0x14] sm:$0xf]
        %v304 = vld [vmem:[#allocation7 + $0x18] sm:$0xf]
        %v305 = vld [vmem:[#allocation7 + $0x1c] sm:$0xf]
        %v306 = vld [vmem:[#allocation7 + $0x20] sm:$0xf]
        %v307 = vld [vmem:[#allocation7 + $0x24] sm:$0xf]
        %v308 = vld [vmem:[#allocation7 + $0x28] sm:$0xf]
        %v309 = vld [vmem:[#allocation7 + $0x2c] sm:$0xf]
        %v310 = vld [vmem:[#allocation7 + $0x30] sm:$0xf]
        %v311 = vld [vmem:[#allocation7 + $0x34] sm:$0xf]
        %v312 = vld [vmem:[#allocation7 + $0x38] sm:$0xf]
        %v313 = vld [vmem:[#allocation7 + $0x3c] sm:$0xf]
        %v322 = vunpack.c.l.b16 %v290
        %v323 = vunpack.c.l.b16 %v291
        %v324 = vunpack.c.l.b16 %v292
        %v325 = vunpack.c.l.b16 %v293
        %v326 = vunpack.c.l.b16 %v294
        %v327 = vunpack.c.l.b16 %v295
        %v328 = vunpack.c.l.b16 %v296
        %v329 = vunpack.c.l.b16 %v297
        %v330 = vpack.c.b16 %v323, %v322
        %v331 = vpack.c.b16 %v325, %v324
        %v332 = vpack.c.b16 %v327, %v326
        %v333 = vpack.c.b16 %v329, %v328
        %v354 = vunpack.c.l.b16 %v298
        %v355 = vunpack.c.l.b16 %v299
        %v356 = vunpack.c.l.b16 %v300
        %v357 = vunpack.c.l.b16 %v301
        %v358 = vunpack.c.l.b16 %v302
        %v359 = vunpack.c.l.b16 %v303
        %v360 = vunpack.c.l.b16 %v304
        %v361 = vunpack.c.l.b16 %v305
        %v362 = vunpack.c.l.b16 %v306
        %v363 = vunpack.c.l.b16 %v307
        %v364 = vunpack.c.l.b16 %v308
        %v365 = vunpack.c.l.b16 %v309
        %v366 = vunpack.c.l.b16 %v310
        %v367 = vunpack.c.l.b16 %v311
        %v368 = vunpack.c.l.b16 %v312
        %v369 = vunpack.c.l.b16 %v313
        %v370 = vpack.c.b16 %v355, %v354
        %v371 = vpack.c.b16 %v357, %v356
        %v372 = vpack.c.b16 %v359, %v358
        %v373 = vpack.c.b16 %v361, %v360
        %v374 = vpack.c.b16 %v363, %v362
        %v375 = vpack.c.b16 %v365, %v364
        %v376 = vpack.c.b16 %v367, %v366
        %v377 = vpack.c.b16 %v369, %v368
        %386 = vmatprep.subr.bf16.mxu0 0
        %387 = vmatpush1.bf16.msra.mxu0 %v377
        %388 = vmatprep.subr.bf16.mxu0 0
        %389 = vmatpush1.bf16.msra.mxu0 %v376
        %390 = vmatprep.subr.bf16.mxu0 0
        %391 = vmatpush1.bf16.msra.mxu0 %v375
        %392 = vmatprep.subr.bf16.mxu0 0
        %393 = vmatpush1.bf16.msra.mxu0 %v374
        %394 = vmatprep.subr.bf16.mxu0 0
        %395 = vmatpush1.bf16.msra.mxu0 %v373
        %396 = vmatprep.subr.bf16.mxu0 0
        %397 = vmatpush1.bf16.msra.mxu0 %v372
        %398 = vmatprep.subr.bf16.mxu0 0
        %399 = vmatpush1.bf16.msra.mxu0 %v371
        %400 = vmatprep.subr.bf16.mxu0 0
        %401 = vmatpush1.bf16.msra.mxu0 %v370
        %402 = vmatprep.subr.bf16.mxu0 0
        %403 = vmatpush2.bf16.msra.mxu0 0
        %404 = vmatprep.subr.bf16.mxu0 0
        %405 = vmatpush2.bf16.msra.mxu0 0
        %406 = vmatprep.subr.bf16.mxu0 0
        %407 = vmatpush2.bf16.msra.mxu0 0
        %408 = vmatprep.subr.bf16.mxu0 0
        %409 = vmatpush2.bf16.msra.mxu0 0
        %410 = vmatprep.subr.bf16.mxu0 0
        %411 = vmatpush2.bf16.msra.mxu0 0
        %412 = vmatprep.subr.bf16.mxu0 0
        %413 = vmatpush2.bf16.msra.mxu0 0
        %414 = vmatprep.subr.bf16.mxu0 0
        %415 = vmatpush2.bf16.msra.mxu0 0
        %416 = vmatprep.subr.bf16.mxu0 0
        %417 = vmatpush2.bf16.msra.mxu0 0
        %418 = vmatprep.mubr.bf16.mxu0 0
        %419 = vmatmul.mubr.bf16.gmra.mxu0 %v330
        %v420 = vpop.f32.mrf.mxu0
        %v421 = vadd.f32 0.0, %v420
        %v422 = vpop.f32.mrf.mxu0
        %v423 = vpop.f32.mrf.mxu0
        %v424 = vadd.f32 0.0, %v423
        %v425 = vpop.f32.mrf.mxu0
        %426 = vmatprep.mubr.bf16.mxu0 0
        %427 = vmatmul.mubr.bf16.gmra.mxu0 %v331
        %v428 = vpop.f32.mrf.mxu0
        %v429 = vadd.f32 0.0, %v428
        %v430 = vpop.f32.mrf.mxu0
        %v431 = vpop.f32.mrf.mxu0
        %v432 = vadd.f32 0.0, %v431
        %v433 = vpop.f32.mrf.mxu0
        %434 = vmatprep.mubr.bf16.mxu0 0
        %435 = vmatmul.mubr.bf16.gmra.mxu0 %v332
        %v436 = vpop.f32.mrf.mxu0
        %v437 = vadd.f32 0.0, %v436
        %v438 = vpop.f32.mrf.mxu0
        %v439 = vpop.f32.mrf.mxu0
        %v440 = vadd.f32 0.0, %v439
        %v441 = vpop.f32.mrf.mxu0
        %442 = vmatprep.mubr.bf16.mxu0 0
        %443 = vmatmul.mubr.bf16.gmra.mxu0 %v333
        %v444 = vpop.f32.mrf.mxu0
        %v445 = vadd.f32 0.0, %v444
        %v446 = vpop.f32.mrf.mxu0
        %v447 = vpop.f32.mrf.mxu0
        %v448 = vadd.f32 0.0, %v447
        %v449 = vpop.f32.mrf.mxu0
        %450 = vdwg.mxu0
        %451 = vst [vmem:[%s276] sm:$0xff] %v421
        %452 = vst [vmem:[%s276 + $0x8] sm:$0xff] %v424
        %453 = vst [vmem:[%s276 + $0x10] sm:$0xff] %v429
        %454 = vst [vmem:[%s276 + $0x18] sm:$0xff] %v432
        %455 = vst [vmem:[%s276 + $0x20] sm:$0xff] %v437
        %456 = vst [vmem:[%s276 + $0x28] sm:$0xff] %v440
        %457 = vst [vmem:[%s276 + $0x30] sm:$0xff] %v445
        %458 = vst [vmem:[%s276 + $0x38] sm:$0xff] %v448
        %v459 = vld [vmem:[#allocation2] sm:$0x1]
        %v460 = vadd.f32 %v421, %v424
        %v461 = vadd.f32 %v460, %v429
        %v462 = vadd.f32 %v461, %v432
        %v463 = vadd.f32 %v462, %v437
        %v464 = vadd.f32 %v463, %v440
        %v465 = vadd.f32 %v464, %v445
        %v466 = vadd.f32 %v465, %v448
        %v467 = vrot.slane %v466, 4
        %v468 = vadd.f32 %v466, %v467
        %v469 = vrot.slane %v468, 2
        %v470 = vadd.f32 %v468, %v469
        %v471 = vrot.slane %v470, 1
        %v472 = vadd.f32 %v470, %v471
        %v473 = vadd.f32 %v459, %v472
        %474 = vst [vmem:[#allocation2] sm:$0x1] %v473
        %v475 = vld [vmem:[#allocation3] sm:$0x1]
        %v476 = vmul.f32 %v421, %v421
        %v477 = vmul.f32 %v424, %v424
        %v478 = vmul.f32 %v429, %v429
        %v479 = vmul.f32 %v432, %v432
        %v480 = vmul.f32 %v437, %v437
        %v481 = vmul.f32 %v440, %v440
        %v482 = vmul.f32 %v445, %v445
        %v483 = vmul.f32 %v448, %v448
        %v484 = vadd.f32 %v476, %v477
        %v485 = vadd.f32 %v484, %v478
        %v486 = vadd.f32 %v485, %v479
        %v487 = vadd.f32 %v486, %v480
        %v488 = vadd.f32 %v487, %v481
        %v489 = vadd.f32 %v488, %v482
        %v490 = vadd.f32 %v489, %v483
        %v491 = vrot.slane %v490, 4
        %v492 = vadd.f32 %v490, %v491
        %v493 = vrot.slane %v492, 2
        %v494 = vadd.f32 %v492, %v493
        %v495 = vrot.slane %v494, 1
        %v496 = vadd.f32 %v494, %v495
        %v497 = vadd.f32 %v475, %v496
        %498 = vst [vmem:[#allocation3] sm:$0x1] %v497
        %p499 = scmp.eq.s32.totalorder %s26, 1
        // Predicated region
        $region49: #{tpu_custom_call.1} parent=35 // pred_check
          %p500 = pneg %p499
        $region50: #{tpu_custom_call.1} parent=35 // pred_check_branch
          %502 = sbr.rel (%p500) target = $region52
        $region51: #{tpu_custom_call.1} parent=35 // pred_region
          %v503 = vld [vmem:[#allocation2] sm:$0x1]
          %v504 = vmul.f32 %v503, 0.0078125
          %v505 = vld [vmem:[#allocation3] sm:$0x1]
          %v506 = vmul.f32 %v505, 0.0078125
          %v507 = vmul.f32 %v504, %v504
          %v508 = vsub.f32 %v506, %v507
          %v509 = vmax.f32 %v508, 0.0
          %v510 = vld [vmem:[%s2] sm:$0x1]
          %v511 = vadd.f32 %v509, 1e-05
          %v512 = vrsqrt.pop %v511
          %v513 = vmul.f32 %v510, %v512
          %514 = vst [vmem:[#allocation10] sm:$0x1] %v513
          %v515 = vld [vmem:[%s3] sm:$0x1]
          %v516 = vmul.f32 %v504, %v513
          %v517 = vsub.f32 %v515, %v516
          %518 = vst [vmem:[#allocation12] sm:$0x1] %v517
        $region52: #{tpu_custom_call.1} parent=35 // pred_fallthru
          _
        %s519 = sand.u32 %s123, 1
        %s520 = scalar_lea.sflag [#allocation6], %s519
        %s521 = sand.u32 %s123, 1
        %s522 = smul.addr %s521, 64
        %s523 = scalar_lea.vmem [#allocation9], %s522
        // Predicated region
        $region53: #{tpu_custom_call.1} parent=35 // pred_check
          %p524 = pneg %p133
        $region54: #{tpu_custom_call.1} parent=35 // pred_check_branch
          %526 = sbr.rel (%p524) target = $region56
        $region55: #{tpu_custom_call.1} parent=35 // pred_region
          %s527 = smul.u32 8, %s26
          %s529 = ssub.s32 1024, 1024
          %530 = vsyncadd %s520, %s529
          %s531 = smul.addr %s527, 128
          %s532 = scalar_lea.hbm %s4, %s531
          %s533 = sshll.u32 %s523, 4
          %s534 = int_to_ptr.vmem [resolvable:$true] %s533
          %539 = dma.vmem_to_hbm [thread:$0]  %s534, 1024, %s532, %s520, 128, 128, 8
        $region56: #{tpu_custom_call.1} parent=35 // pred_fallthru
          _
        // Predicated region
        $region57: #{tpu_custom_call.1} parent=35 // pred_check
          %p540 = pneg %p154
        $region58: #{tpu_custom_call.1} parent=35 // pred_check_branch
          %542 = sbr.rel (%p540) target = $region60
        $region59: #{tpu_custom_call.1} parent=35 // pred_region
          %s544 = ssub.s32 16, 16
          %545 = vsyncadd [#allocation11], %s544
          %s547 = sshll.u32 [#allocation10], 4
          %s548 = int_to_ptr.vmem [resolvable:$true] %s547
          %550 = dma.vmem_to_hbm [thread:$0]  %s548, 16, %s5, [#allocation11]
        $region60: #{tpu_custom_call.1} parent=35 // pred_fallthru
          _
        // Predicated region
        $region61: #{tpu_custom_call.1} parent=35 // pred_check
          %p551 = pneg %p175
        $region62: #{tpu_custom_call.1} parent=35 // pred_check_branch
          %553 = sbr.rel (%p551) target = $region64
        $region63: #{tpu_custom_call.1} parent=35 // pred_region
          %s555 = ssub.s32 16, 16
          %556 = vsyncadd [#allocation11], %s555
          %s558 = sshll.u32 [#allocation12], 4
          %s559 = int_to_ptr.vmem [resolvable:$true] %s558
          %561 = dma.vmem_to_hbm [thread:$0]  %s559, 16, %s6, [#allocation11]
        $region64: #{tpu_custom_call.1} parent=35 // pred_fallthru
          _
        // Predicated region
        $region65: #{tpu_custom_call.1} parent=35 // pred_check
          %p562 = pneg %p154
        $region66: #{tpu_custom_call.1} parent=35 // pred_check_branch
          %564 = sbr.rel (%p562) target = $region68
        $region67: #{tpu_custom_call.1} parent=35 // pred_region
          %565 = dma.done [#allocation11], 16
        $region68: #{tpu_custom_call.1} parent=35 // pred_fallthru
          _
        // Predicated region
        $region69: #{tpu_custom_call.1} parent=35 // pred_check
          %p566 = pneg %p175
        $region70: #{tpu_custom_call.1} parent=35 // pred_check_branch
          %568 = sbr.rel (%p566) target = $region72
        $region71: #{tpu_custom_call.1} parent=35 // pred_region
          %569 = dma.done [#allocation11], 16
        $region72: #{tpu_custom_call.1} parent=35 // pred_fallthru
          _
      $region36: #{tpu_custom_call.1} parent=5 // pred_fallthru
        _
      %p570 = scmp.le.s32.totalorder 2, %s21
      // Predicated region
      $region73: #{tpu_custom_call.1} parent=5 // pred_check
        %p571 = pneg %p570
      $region74: #{tpu_custom_call.1} parent=5 // pred_check_branch
        %573 = sbr.rel (%p571) target = $region76
      $region75: #{tpu_custom_call.1} parent=5 // pred_region
        %s574 = ssub.s32 %s21, 2
        // Predicated region
        $region77: #{tpu_custom_call.1} parent=75 // pred_check
          %p575 = pneg %p139
        $region78: #{tpu_custom_call.1} parent=75 // pred_check_branch
          %577 = sbr.rel (%p575) target = $region80
        $region79: #{tpu_custom_call.1} parent=75 // pred_region
          %s578 = sand.u32 %s124, 1
          %s579 = scalar_lea.sflag [#allocation6], %s578
          %s580 = sand.u32 %s124, 1
          %s581 = smul.addr %s580, 64
          %s582 = scalar_lea.vmem [#allocation9], %s581
          %583 = dma.done %s579, 1024
        $region80: #{tpu_custom_call.1} parent=75 // pred_fallthru
          _
      $region76: #{tpu_custom_call.1} parent=5 // pred_fallthru
        _
    $region6: #{tpu_custom_call.1} parent=1 // loop_footer
      %s25 = sadd.s32 1, %s21
    $region7: #{tpu_custom_call.1} parent=1 // loop_footer_branch
      %20 = sbr.rel target = $region3
    $region8: #{tpu_custom_call.1} parent=1 // loop_exit
      _
    %584 = vsyncpa [#allocation5], 1
    %s585 = scalar_lea.sflag [#allocation5], 1
    %586 = vsyncpa %s585, 1
    %587 = vsyncpa [#allocation8], 1
    %588 = vsyncpa [#allocation6], 1
    %s589 = scalar_lea.sflag [#allocation6], 1
    %590 = vsyncpa %s589, 1
    %591 = vsyncpa [#allocation11], 1

</llo_original>
